<compile_context>
chip_gen: v6e
topology: v6e:2x2x1
jax: 0.10.0
libtpu: 0.0.40
codegen_flags: <defaults>
</compile_context>

<pallas_src>
import functools

import jax
import jax.numpy as jnp
from jax.experimental import pallas as pl
from jax.experimental.pallas import tpu as pltpu

INV_SQRT2 = 0.7071067811865476  # 1/sqrt(2)


def _round_up(n, m):
    return ((n + m - 1) // m) * m


def _cdiv(a, b):
    return (a + b - 1) // b


def _choose_k_tile(d_in, tk_max=512):
    """K (contraction) tile: multiple of 128, <= tk_max; padded D_in is a multiple of it."""
    tk = min(_round_up(d_in, 128), tk_max)
    kp = _round_up(d_in, tk)
    return tk, kp


def _clip_branch_kernel(x_ref, w_ref, b_ref, o_ref, acc_ref, *, matmul_dtype, approx_gelu):
    """One (branch, batch-tile, k-tile) grid point.

    x_ref:   (tb, tk)     input tile
    w_ref:   (tk, Np)     pre-transposed weight tile (W^T block)
    b_ref:   (1, Np)      bias row
    o_ref:   (tb, Np)     output tile (written on last k step only)
    acc_ref: (tb, Np) f32 VMEM accumulator (persists across the k axis)
    """
    k = pl.program_id(2)

    @pl.when(k == 0)
    def _():
        acc_ref[...] = jnp.zeros_like(acc_ref)

    x = x_ref[...]
    w = w_ref[...]
    if matmul_dtype is not None:
        # bf16 operands feed the v6e/v7x MXU at full rate; accumulation stays f32.
        x = x.astype(matmul_dtype)
        w = w.astype(matmul_dtype)

    # Partial y += x_tile @ W^T_tile ; contracts x's lane dim with W^T's sublane dim (MXU-native).
    acc_ref[...] += jnp.dot(x, w, preferred_element_type=jnp.float32)

    @pl.when(k == pl.num_programs(2) - 1)
    def _():
        y = acc_ref[...] + b_ref[...].astype(jnp.float32)
        if approx_gelu:
            g = jax.nn.gelu(y, approximate=True)          # tanh -> EUP slot
        else:
            # Exact (erf-based) GELU, matching torch.nn.GELU() default.
            g = 0.5 * y * (1.0 + jax.lax.erf(y * INV_SQRT2))
        # F.normalize(dim=-1): x / max(||x||, 1e-12) == x * rsqrt(max(||x||^2, 1e-24)).
        sq = jnp.sum(g * g, axis=-1, keepdims=True)
        inv = jax.lax.rsqrt(jnp.maximum(sq, 1e-24))
        o_ref[...] = (g * inv).astype(o_ref.dtype)


def pack_params(params, *, tk_max=512):
    """One-time pack of torch-layout per-branch params (do this at init, not per forward).

    Stacks branches (0 = text, 1 = image), transposes weights to (2, D_in, D_out), and pads
    D_in / D_out up to the kernel's tile sizes. Padded rows/cols are zero -> contribute
    nothing to the matmul or to the L2 norm.
    """
    tw, iw = params["text_w"], params["image_w"]
    d_out, d_in = tw.shape
    tk, kp = _choose_k_tile(d_in, tk_max)
    np_ = _round_up(d_out, 128)

    w = jnp.stack([tw, iw]).transpose(0, 2, 1)                      # (2, D_in, D_out) = W^T
    w = jnp.pad(w, ((0, 0), (0, kp - d_in), (0, np_ - d_out)))
    b = jnp.stack([params["text_b"], params["image_b"]])[:, None, :]  # (2, 1, D_out)
    b = jnp.pad(b, ((0, 0), (0, 0), (0, np_ - d_out)))
    return {"w": w, "b": b, "d_in": d_in, "d_out": d_out, "tk": tk}


def clip1_forward(text_features, image_features, packed, *, tile_b=256,
                  matmul_dtype=None, approx_gelu=False):
    """CLIP_1.forward: returns (text_embedding, image_embedding).

    text_features, image_features: [B, D_in]; packed: output of pack_params().
    """
    B, d_in = text_features.shape
    assert image_features.shape == (B, d_in), "branches must share batch and feature size"
    assert d_in == packed["d_in"], "input feature size must match packed params"

    w_all, b_all = packed["w"], packed["b"]
    tk = packed["tk"]
    _, Kp, Np = w_all.shape
    d_out = packed["d_out"]

    # Balanced ragged-batch tiles: pad at most one sublane group per tile.
    ntiles = max(1, _cdiv(B, tile_b))
    tb = _round_up(_cdiv(B, ntiles), 8)
    Bp = ntiles * tb

    x_all = jnp.stack([text_features, image_features])              # (2, B, D_in)
    if Bp != B or Kp != d_in:
        x_all = jnp.pad(x_all, ((0, 0), (0, Bp - B), (0, Kp - d_in)))

    # Explicit scoped-VMEM budget: double-buffered x / w / b / out blocks + f32 accumulator.
    itx = x_all.dtype.itemsize
    itw = w_all.dtype.itemsize
    block_bytes = (2 * (tb * tk * itx + tk * Np * itw + Np * itw)
                   + 2 * tb * Np * itx + tb * Np * 4)
    vmem_limit = int(min(64 << 20, max(32 << 20, 2 * block_bytes)))

    grid = (2, Bp // tb, Kp // tk)
    out = pl.pallas_call(
        functools.partial(_clip_branch_kernel, matmul_dtype=matmul_dtype,
                          approx_gelu=approx_gelu),
        out_shape=jax.ShapeDtypeStruct((2, Bp, Np), text_features.dtype),
        grid_spec=pltpu.PrefetchScalarGridSpec(
            num_scalar_prefetch=0,
            grid=grid,
            in_specs=[
                pl.BlockSpec((None, tb, tk), lambda e, i, k: (e, i, k)),   # input tile
                pl.BlockSpec((None, tk, Np), lambda e, i, k: (e, k, 0)),   # W^T tile
                pl.BlockSpec((None, 1, Np), lambda e, i, k: (e, 0, 0)),    # bias row
            ],
            out_specs=pl.BlockSpec((None, tb, Np), lambda e, i, k: (e, i, 0)),
            scratch_shapes=[pltpu.VMEM((tb, Np), jnp.float32)],
        ),
        compiler_params=pltpu.CompilerParams(
            dimension_semantics=("parallel", "parallel", "arbitrary"),
            vmem_limit_bytes=vmem_limit,
        ),
    )(x_all, w_all, b_all)

    return out[0, :B, :d_out], out[1, :B, :d_out]


def init_params(key, input_size, output_size, dtype=jnp.float32):
    """Deterministic init mimicking nn.Linear shapes: weight (out, in), bias (out,)."""
    k1, k2, k3, k4 = jax.random.split(key, 4)
    bound = 1.0 / (input_size ** 0.5)
    return {
        "image_w": jax.random.uniform(k1, (output_size, input_size), dtype, -bound, bound),
        "image_b": jax.random.uniform(k2, (output_size,), dtype, -bound, bound),
        "text_w": jax.random.uniform(k3, (output_size, input_size), dtype, -bound, bound),
        "text_b": jax.random.uniform(k4, (output_size,), dtype, -bound, bound),
    }


if __name__ == "__main__":
    # Small shapes consistent with the module (Linear over last feature dim).
    # B intentionally NOT a multiple of 8 to exercise the balanced-padding path.
    B, D_in, D_out = 12, 128, 128

    key = jax.random.PRNGKey(0)
    kp_, kt, ki = jax.random.split(key, 3)
    params = init_params(kp_, D_in, D_out)
    packed = pack_params(params)          # one-time stack + transpose + pad (not per forward)

    text_features = jax.random.normal(kt, (B, D_in), jnp.float32)
    image_features = jax.random.normal(ki, (B, D_in), jnp.float32)

    # f32 operands here to hold the 1e-5 check; pass matmul_dtype=jnp.bfloat16 on v6e/v7x
    # for MXU peak (then relax tolerance).
    text_emb, image_emb = clip1_forward(text_features, image_features, packed)
    jax.block_until_ready((text_emb, image_emb))

    # Cross-check against pure-JAX reference (same math as the torch module).
    def ref_branch(x, w, b):
        y = x @ w.T + b
        g = jax.nn.gelu(y, approximate=False)
        n = jnp.maximum(jnp.linalg.norm(g, axis=-1, keepdims=True), 1e-12)
        return g / n

    ref_t = ref_branch(text_features, params["text_w"], params["text_b"])
    ref_i = ref_branch(image_features, params["image_w"], params["image_b"])
    assert text_emb.shape == (B, D_out) and image_emb.shape == (B, D_out)
    assert jnp.allclose(text_emb, ref_t, atol=1e-5, rtol=1e-5)
    assert jnp.allclose(image_emb, ref_i, atol=1e-5, rtol=1e-5)

    print("KERNEL_OK")
</pallas_src>

<mosaic_0001>
module attributes {stable_mosaic.version = 11 : i64} {
  func.func @_clip_branch_kernel(%arg0: i32, %arg1: i32, %arg2: i32, %arg3: memref<1x16x128xf32, #tpu.memory_space<vmem>>, %arg4: memref<1x128x128xf32, #tpu.memory_space<vmem>>, %arg5: memref<1x1x128xf32, #tpu.memory_space<vmem>>, %arg6: memref<1x16x128xf32, #tpu.memory_space<vmem>>, %arg7: memref<16x128xf32, #tpu.memory_space<vmem>>) attributes {dimension_semantics = [#tpu.dimension_semantics<parallel>, #tpu.dimension_semantics<parallel>, #tpu.dimension_semantics<arbitrary>], iteration_bounds = array<i64: 2, 1, 1>, scalar_prefetch = 0 : i64, scratch_operands = 1 : i64, tpu.core_type = #tpu.core_type<tc>, window_params = [{transform_indices = @transform_0, window_bounds = array<i64: 1, 16, 128>}, {transform_indices = @transform_1, window_bounds = array<i64: 1, 128, 128>}, {transform_indices = @transform_2, window_bounds = array<i64: 1, 1, 128>}, {transform_indices = @transform_3, window_bounds = array<i64: 1, 16, 128>}]} {
    %c0_i32 = arith.constant 0 : i32
    %0 = arith.cmpi eq, %arg2, %c0_i32 : i32
    %1 = arith.extui %0 : i1 to i32
    %c0_i32_0 = arith.constant 0 : i32
    %2 = arith.cmpi ne, %1, %c0_i32_0 : i32
    scf.if %2 {
      %cst_12 = arith.constant 0.000000e+00 : f32
      %14 = vector.broadcast %cst_12 : f32 to vector<16x128xf32>
      %c0_13 = arith.constant 0 : index
      %c0_14 = arith.constant 0 : index
      %15 = vector.load %arg7[%c0_13, %c0_14] : memref<16x128xf32, #tpu.memory_space<vmem>>, vector<16x128xf32>
      tpu.vector_store %arg7[%c0_13, %c0_14], %14 {strides = array<i32>} : memref<16x128xf32, #tpu.memory_space<vmem>>, vector<16x128xf32>,
    } else {
    }
    %c0 = arith.constant 0 : index
    %c0_1 = arith.constant 0 : index
    %c0_2 = arith.constant 0 : index
    %3 = vector.load %arg3[%c0, %c0_1, %c0_2] : memref<1x16x128xf32, #tpu.memory_space<vmem>>, vector<1x16x128xf32>
    %4 = vector.shape_cast %3 : vector<1x16x128xf32> to vector<16x128xf32>
    %c0_3 = arith.constant 0 : index
    %c0_4 = arith.constant 0 : index
    %c0_5 = arith.constant 0 : index
    %5 = vector.load %arg4[%c0_3, %c0_4, %c0_5] : memref<1x128x128xf32, #tpu.memory_space<vmem>>, vector<1x128x128xf32>
    %6 = vector.shape_cast %5 : vector<1x128x128xf32> to vector<128x128xf32>
    %c0_6 = arith.constant 0 : index
    %c0_7 = arith.constant 0 : index
    %7 = vector.load %arg7[%c0_6, %c0_7] : memref<16x128xf32, #tpu.memory_space<vmem>>, vector<16x128xf32>
    %cst = arith.constant dense<0.000000e+00> : vector<16x128xf32>
    %8 = tpu.matmul %4, %6, %cst {dimension_numbers = #tpu.dot_dimension_numbers<[1], [0], [0], [1], [0, 0, 1, 1], [], []>} : vector<16x128xf32>, vector<128x128xf32>, vector<16x128xf32> -> vector<16x128xf32>
    %9 = arith.addf %7, %8 : vector<16x128xf32>
    %c0_8 = arith.constant 0 : index
    %c0_9 = arith.constant 0 : index
    %10 = vector.load %arg7[%c0_8, %c0_9] : memref<16x128xf32, #tpu.memory_space<vmem>>, vector<16x128xf32>
    tpu.vector_store %arg7[%c0_8, %c0_9], %9 {strides = array<i32>} : memref<16x128xf32, #tpu.memory_space<vmem>>, vector<16x128xf32>,
    %c0_i32_10 = arith.constant 0 : i32
    %11 = arith.cmpi eq, %arg2, %c0_i32_10 : i32
    %12 = arith.extui %11 : i1 to i32
    %c0_i32_11 = arith.constant 0 : i32
    %13 = arith.cmpi ne, %12, %c0_i32_11 : i32
    scf.if %13 {
      %c0_12 = arith.constant 0 : index
      %c0_13 = arith.constant 0 : index
      %14 = vector.load %arg7[%c0_12, %c0_13] : memref<16x128xf32, #tpu.memory_space<vmem>>, vector<16x128xf32>
      %c0_14 = arith.constant 0 : index
      %c0_15 = arith.constant 0 : index
      %c0_16 = arith.constant 0 : index
      %15 = vector.load %arg5[%c0_14, %c0_15, %c0_16] : memref<1x1x128xf32, #tpu.memory_space<vmem>>, vector<1x1x128xf32>
      %16 = vector.shape_cast %15 : vector<1x1x128xf32> to vector<1x128xf32>
      %17 = vector.broadcast %16 : vector<1x128xf32> to vector<16x128xf32>
      %18 = arith.addf %14, %17 : vector<16x128xf32>
      %cst_17 = arith.constant 5.000000e-01 : f32
      %19 = vector.broadcast %cst_17 : f32 to vector<16x128xf32>
      %20 = arith.mulf %19, %18 : vector<16x128xf32>
      %cst_18 = arith.constant 0.707106769 : f32
      %21 = vector.broadcast %cst_18 : f32 to vector<16x128xf32>
      %22 = arith.mulf %18, %21 : vector<16x128xf32>
      %23 = math.erf %22 : vector<16x128xf32>
      %cst_19 = arith.constant 1.000000e+00 : f32
      %24 = vector.broadcast %cst_19 : f32 to vector<16x128xf32>
      %25 = arith.addf %24, %23 : vector<16x128xf32>
      %26 = arith.mulf %20, %25 : vector<16x128xf32>
      %27 = arith.mulf %26, %26 : vector<16x128xf32>
      %cst_20 = arith.constant dense<0.000000e+00> : vector<16xf32>
      %28 = vector.multi_reduction <add>, %27, %cst_20 [1] : vector<16x128xf32> to vector<16xf32>
      %29 = vector.shape_cast %28 : vector<16xf32> to vector<16x1xf32>
      %cst_21 = arith.constant 1.000000e-24 : f32
      %30 = vector.broadcast %cst_21 : f32 to vector<16x1xf32>
      %31 = arith.maximumf %29, %30 : vector<16x1xf32>
      %32 = math.rsqrt %31 : vector<16x1xf32>
      %33 = vector.broadcast %32 : vector<16x1xf32> to vector<16x128xf32>
      %34 = arith.mulf %26, %33 : vector<16x128xf32>
      %c0_22 = arith.constant 0 : index
      %c0_23 = arith.constant 0 : index
      %c0_24 = arith.constant 0 : index
      %35 = vector.load %arg6[%c0_22, %c0_23, %c0_24] : memref<1x16x128xf32, #tpu.memory_space<vmem>>, vector<1x16x128xf32>
      %36 = vector.shape_cast %35 : vector<1x16x128xf32> to vector<16x128xf32>
      %37 = vector.shape_cast %34 : vector<16x128xf32> to vector<1x16x128xf32>
      tpu.vector_store %arg6[%c0_22, %c0_23, %c0_24], %37 {strides = array<i32>} : memref<1x16x128xf32, #tpu.memory_space<vmem>>, vector<1x16x128xf32>,
    } else {
    }
    return
  }
  func.func @transform_0(%arg0: i32, %arg1: i32, %arg2: i32) -> (i32, i32, i32) {
    %c0_i32 = arith.constant 0 : i32
    return %arg0, %arg1, %arg2 : i32, i32, i32
  }
  func.func @transform_1(%arg0: i32, %arg1: i32, %arg2: i32) -> (i32, i32, i32) {
    %c0_i32 = arith.constant 0 : i32
    %c0_i32_0 = arith.constant 0 : i32
    return %arg0, %arg2, %c0_i32 : i32, i32, i32
  }
  func.func @transform_2(%arg0: i32, %arg1: i32, %arg2: i32) -> (i32, i32, i32) {
    %c0_i32 = arith.constant 0 : i32
    %c0_i32_0 = arith.constant 0 : i32
    %c0_i32_1 = arith.constant 0 : i32
    return %arg0, %c0_i32, %c0_i32_0 : i32, i32, i32
  }
  func.func @transform_3(%arg0: i32, %arg1: i32, %arg2: i32) -> (i32, i32, i32) {
    %c0_i32 = arith.constant 0 : i32
    %c0_i32_0 = arith.constant 0 : i32
    return %arg0, %arg1, %c0_i32 : i32, i32, i32
  }
}

</mosaic_0001>

<llo_original>
// kernel: tpu_custom_call.1
$region0: #{tpu_custom_call.1}
  #allocation0 [shape = 'u32[]', space=smem, size = 0x4, offset = 0x4, fixed_abs, tag = 'smem constant byte address 0x4 - core index']
  #allocation1 [shape = 'u32[144,128]{1,0:T(1,128)}', space=vmem, size = 0x12000, scoped, tag = 'internal scratch']
  #allocation2 [shape = 'f32[16,128]{1,0:T(8,128)}', space=vmem, size = 0x2000, scoped, tag = 'scratch operand']
  %s0 = inlined_call_operand.hbm [shape: f32[2,16,128], index: 0, kind: input, shape index: {}]
  %s1 = inlined_call_operand.hbm [shape: f32[2,128,128], index: 1, kind: input, shape index: {}]
  %s2 = inlined_call_operand.vmem [shape: f32[2,1,128], index: 2, kind: input, shape index: {}]
  %s3 = inlined_call_operand.hbm [shape: f32[2,16,128], index: 3, kind: output, shape index: {}]
  %s4 = sld [smem:[#allocation0]]
  $region61: #{tpu_custom_call.1} parent=0
    _
  %s6 = ssub.s32 1, %s4
  %s7 = scalar_select 0, %s6, %s4
  $region1: #{tpu_custom_call.1} parent=0
    #allocation3 [shape = 'u8[16384]{0}', space=vmem, size = 0x4000, scoped, tag = 'input window, operand 0']
    #allocation4 [shape = 's32[2]{0}', space=sflag, size = 0x8, scoped, tag = 'scoped memory for tpu_custom_call.1']
    #allocation5 [shape = 's32[2]{0}', space=sflag, size = 0x8, scoped, tag = 'scoped memory for tpu_custom_call.1']
    #allocation6 [shape = 'u8[131072]{0}', space=vmem, size = 0x20000, scoped, tag = 'input window, operand 1']
    #allocation7 [shape = 's32[2]{0}', space=sflag, size = 0x8, scoped, tag = 'scoped memory for tpu_custom_call.1']
    #allocation8 [shape = 'u8[16384]{0}', space=vmem, size = 0x4000, scoped, tag = 'output window, operand 0']
    %8 = vsyncpa [#allocation4], 0
    %s9 = scalar_lea.sflag [#allocation4], 1
    %10 = vsyncpa %s9, 0
    %11 = vsyncpa [#allocation7], 0
    %s12 = scalar_lea.sflag [#allocation7], 1
    %13 = vsyncpa %s12, 0
    %14 = vsyncpa [#allocation5], 0
    %s15 = scalar_lea.sflag [#allocation5], 1
    %16 = vsyncpa %s15, 0
    loop: start=0, step=1, limit=4
    $region2: #{tpu_custom_call.1} parent=1 // loop_pre_header
      _
    $region3: #{tpu_custom_call.1} parent=1 // loop_header
      %s18 = sphi 0, %s22
      %p19 = scmp.ge.s32.totalorder %s18, 4
      %s25 = sphi 0, %s44
      %s26 = sphi 0, %s40
      %s27 = sphi 0, %s36
      %s28 = sphi 0, %s25
      %s29 = sphi 0, %s26
      %s30 = sphi 0, %s27
      %s31 = sphi 0, %s28
      %s32 = sphi 0, %s29
      %s33 = sphi 0, %s30
      %s51 = sphi 0, %s53
      %s54 = sphi 0, %s51
      %s55 = sphi 0, %s54
      %s71 = sphi 0, %s55
      %s79 = sphi 0, %s81
      %s82 = sphi 0, %s79
      %s83 = sphi 0, %s82
      %s99 = sphi 0, %s83
      %s105 = sphi 0, %s107
      %s108 = sphi 0, %s105
      %s109 = sphi 0, %s108
      %s125 = sphi 0, %s109
      %s133 = sphi 0, %s135
      %s136 = sphi 0, %s133
      %s137 = sphi 0, %s136
      %s153 = sphi 0, %s137
    $region4: #{tpu_custom_call.1} parent=1 // loop_header_branch
      %21 = sbr.rel (%p19) target = $region8
    $region5: #{tpu_custom_call.1} parent=1 // loop_body
      %s23 = ssub.s32 %s18, 1
      %s24 = ssub.s32 %s18, 2
      %s34 = sadd.s32 1, %s27
      %p35 = scmp.ge.s32.totalorder %s34, 1
      %s36 = scalar_select %p35, 0, %s34
      %s37 = sadd.s32 1, %s26
      %s38 = scalar_select %p35, %s37, %s26
      %p39 = scmp.ge.s32.totalorder %s38, 1
      %s40 = scalar_select %p39, 0, %s38
      %s41 = sadd.s32 1, %s25
      %s42 = scalar_select %p39, %s41, %s25
      %p43 = scmp.ge.s32.totalorder %s42, 2
      %s44 = scalar_select %p43, 0, %s42
      %s45 = ssub.s32 %s25, %s44
      %s46 = ssub.s32 %s26, %s40
      %s47 = sor.u32 %s45, %s46
      %s48 = ssub.s32 %s27, %s36
      %s49 = sor.u32 %s47, %s48
      %p50 = scmp.eq.s32.totalorder %s49, 0
      %s52 = sadd.s32 %s51, 1
      %s53 = scalar_select %p50, %s51, %s52
      %p56 = pneg %p50
      %p57 = scmp.eq.s32.totalorder %s18, 1
      %p58 = por %p56, %p57
      %p59 = scmp.ne.s32.totalorder %s51, %s54
      %p60 = scmp.eq.s32.totalorder %s18, 0
      %p61 = por %p59, %p60
      %p62 = scmp.ne.s32.totalorder %s51, %s54
      %p63 = scmp.eq.s32.totalorder %s23, 1
      %p64 = por %p62, %p63
      %p65 = scmp.ne.s32.totalorder %s54, %s55
      %p66 = scmp.eq.s32.totalorder %s23, 0
      %p67 = por %p65, %p66
      %p68 = scmp.ne.s32.totalorder %s54, %s55
      %p69 = scmp.eq.s32.totalorder %s24, 1
      %p70 = por %p68, %p69
      %p72 = scmp.ne.s32.totalorder %s55, %s71
      %p73 = scmp.eq.s32.totalorder %s24, 0
      %p74 = por %p72, %p73
      %s75 = ssub.s32 %s25, %s44
      %s76 = ssub.s32 %s27, %s36
      %s77 = sor.u32 %s75, %s76
      %p78 = scmp.eq.s32.totalorder %s77, 0
      %s80 = sadd.s32 %s79, 1
      %s81 = scalar_select %p78, %s79, %s80
      %p84 = pneg %p78
      %p85 = scmp.eq.s32.totalorder %s18, 1
      %p86 = por %p84, %p85
      %p87 = scmp.ne.s32.totalorder %s79, %s82
      %p88 = scmp.eq.s32.totalorder %s18, 0
      %p89 = por %p87, %p88
      %p90 = scmp.ne.s32.totalorder %s79, %s82
      %p91 = scmp.eq.s32.totalorder %s23, 1
      %p92 = por %p90, %p91
      %p93 = scmp.ne.s32.totalorder %s82, %s83
      %p94 = scmp.eq.s32.totalorder %s23, 0
      %p95 = por %p93, %p94
      %p96 = scmp.ne.s32.totalorder %s82, %s83
      %p97 = scmp.eq.s32.totalorder %s24, 1
      %p98 = por %p96, %p97
      %p100 = scmp.ne.s32.totalorder %s83, %s99
      %p101 = scmp.eq.s32.totalorder %s24, 0
      %p102 = por %p100, %p101
      %s103 = ssub.s32 %s25, %s44
      %p104 = scmp.eq.s32.totalorder %s103, 0
      %s106 = sadd.s32 %s105, 1
      %s107 = scalar_select %p104, %s105, %s106
      %p110 = pneg %p104
      %p111 = scmp.eq.s32.totalorder %s18, 1
      %p112 = por %p110, %p111
      %p113 = scmp.ne.s32.totalorder %s105, %s108
      %p114 = scmp.eq.s32.totalorder %s18, 0
      %p115 = por %p113, %p114
      %p116 = scmp.ne.s32.totalorder %s105, %s108
      %p117 = scmp.eq.s32.totalorder %s23, 1
      %p118 = por %p116, %p117
      %p119 = scmp.ne.s32.totalorder %s108, %s109
      %p120 = scmp.eq.s32.totalorder %s23, 0
      %p121 = por %p119, %p120
      %p122 = scmp.ne.s32.totalorder %s108, %s109
      %p123 = scmp.eq.s32.totalorder %s24, 1
      %p124 = por %p122, %p123
      %p126 = scmp.ne.s32.totalorder %s109, %s125
      %p127 = scmp.eq.s32.totalorder %s24, 0
      %p128 = por %p126, %p127
      %s129 = ssub.s32 %s25, %s44
      %s130 = ssub.s32 %s26, %s40
      %s131 = sor.u32 %s129, %s130
      %p132 = scmp.eq.s32.totalorder %s131, 0
      %s134 = sadd.s32 %s133, 1
      %s135 = scalar_select %p132, %s133, %s134
      %p138 = pneg %p132
      %p139 = scmp.eq.s32.totalorder %s18, 1
      %p140 = por %p138, %p139
      %p141 = scmp.ne.s32.totalorder %s133, %s136
      %p142 = scmp.eq.s32.totalorder %s18, 0
      %p143 = por %p141, %p142
      %p144 = scmp.ne.s32.totalorder %s133, %s136
      %p145 = scmp.eq.s32.totalorder %s23, 1
      %p146 = por %p144, %p145
      %p147 = scmp.ne.s32.totalorder %s136, %s137
      %p148 = scmp.eq.s32.totalorder %s23, 0
      %p149 = por %p147, %p148
      %p150 = scmp.ne.s32.totalorder %s136, %s137
      %p151 = scmp.eq.s32.totalorder %s24, 1
      %p152 = por %p150, %p151
      %p154 = scmp.ne.s32.totalorder %s137, %s153
      %p155 = scmp.eq.s32.totalorder %s24, 0
      %p156 = por %p154, %p155
      %p157 = scmp.le.s32.totalorder 1, %s18
      %p158 = scmp.lt.s32.totalorder %s18, 3
      %p159 = pnand %p157, %p158
      %p160 = pneg %p159
      // Predicated region
      $region9: #{tpu_custom_call.1} parent=5 // pred_check
        _
      $region10: #{tpu_custom_call.1} parent=5 // pred_check_branch
        %162 = sbr.rel (%p159) target = $region12
      $region11: #{tpu_custom_call.1} parent=5 // pred_region
        %s163 = ssub.s32 %s18, 1
      $region12: #{tpu_custom_call.1} parent=5 // pred_fallthru
        _
      %p164 = scmp.lt.s32.totalorder %s18, 2
      // Predicated region
      $region13: #{tpu_custom_call.1} parent=5 // pred_check
        %p165 = pneg %p164
      $region14: #{tpu_custom_call.1} parent=5 // pred_check_branch
        %167 = sbr.rel (%p165) target = $region16
      $region15: #{tpu_custom_call.1} parent=5 // pred_region
        // Predicated region
        $region17: #{tpu_custom_call.1} parent=15 // pred_check
          %p168 = pneg %p61
        $region18: #{tpu_custom_call.1} parent=15 // pred_check_branch
          %170 = sbr.rel (%p168) target = $region20
        $region19: #{tpu_custom_call.1} parent=15 // pred_region
          %s171 = sand.u32 %s51, 1
          %s172 = scalar_lea.sflag [#allocation4], %s171
          %s173 = sand.u32 %s51, 1
          %s174 = smul.addr %s173, 16
          %s175 = scalar_lea.vmem [#allocation3], %s174
          %s176 = smul.u32 2, %s26
          %s178 = ssub.s32 256, 256
          %179 = vsyncadd %s172, %s178
          %s180 = sadd.s32 %s27, %s176
          %s181 = smul.addr %s25, 2
          %s182 = sadd.s32 %s180, %s181
          %s183 = smul.addr %s182, 128
          %s184 = scalar_lea.hbm %s0, %s183
          %s185 = sshll.u32 %s175, 4
          %s186 = int_to_ptr.vmem [resolvable:$true] %s185
          %191 = dma.hbm_to_vmem [thread:$0]  %s184, 256, %s186, %s172, 128, 128, 8
        $region20: #{tpu_custom_call.1} parent=15 // pred_fallthru
          _
        // Predicated region
        $region21: #{tpu_custom_call.1} parent=15 // pred_check
          %p192 = pneg %p89
        $region22: #{tpu_custom_call.1} parent=15 // pred_check_branch
          %194 = sbr.rel (%p192) target = $region24
        $region23: #{tpu_custom_call.1} parent=15 // pred_region
          %s195 = sand.u32 %s79, 1
          %s196 = scalar_lea.sflag [#allocation7], %s195
          %s197 = sand.u32 %s79, 1
          %s198 = smul.addr %s197, 128
          %s199 = scalar_lea.vmem [#allocation6], %s198
          %s200 = smul.u32 16, %s27
          %s202 = ssub.s32 2048, 2048
          %203 = vsyncadd %s196, %s202
          %s204 = smul.addr %s25, 16
          %s205 = sadd.s32 %s200, %s204
          %s206 = smul.addr %s205, 128
          %s207 = scalar_lea.hbm %s1, %s206
          %s208 = sshll.u32 %s199, 4
          %s209 = int_to_ptr.vmem [resolvable:$true] %s208
          %214 = dma.hbm_to_vmem [thread:$0]  %s207, 2048, %s209, %s196, 128, 128, 8
        $region24: #{tpu_custom_call.1} parent=15 // pred_fallthru
          _
        // Predicated region
        $region25: #{tpu_custom_call.1} parent=15 // pred_check
          %p215 = pneg %p115
        $region26: #{tpu_custom_call.1} parent=15 // pred_check_branch
          %217 = sbr.rel (%p215) target = $region28
        $region27: #{tpu_custom_call.1} parent=15 // pred_region
          %p218 = scmp.lt.s32.totalorder %s25, 1
          %s219 = scalar_select %p218, %s25, 1
          %s220 = scalar_lea.vmem %s2, %s219
        $region28: #{tpu_custom_call.1} parent=15 // pred_fallthru
          _
      $region16: #{tpu_custom_call.1} parent=5 // pred_fallthru
        _
      %p221 = scmp.le.s32.totalorder 1, %s18
      %p222 = scmp.lt.s32.totalorder %s18, 3
      %p223 = pnand %p221, %p222
      %p224 = pneg %p223
      // Predicated region
      $region29: #{tpu_custom_call.1} parent=5 // pred_check
        _
      $region30: #{tpu_custom_call.1} parent=5 // pred_check_branch
        %226 = sbr.rel (%p223) target = $region32
      $region31: #{tpu_custom_call.1} parent=5 // pred_region
        %s227 = ssub.s32 %s18, 1
        %s228 = sand.u32 %s54, 1
        %s229 = scalar_lea.sflag [#allocation4], %s228
        %s230 = sand.u32 %s54, 1
        %s231 = smul.addr %s230, 16
        %s232 = scalar_lea.vmem [#allocation3], %s231
        // Predicated region
        $region33: #{tpu_custom_call.1} parent=31 // pred_check
          %p233 = pneg %p67
        $region34: #{tpu_custom_call.1} parent=31 // pred_check_branch
          %235 = sbr.rel (%p233) target = $region36
        $region35: #{tpu_custom_call.1} parent=31 // pred_region
          %236 = dma.done %s229, 256
        $region36: #{tpu_custom_call.1} parent=31 // pred_fallthru
          _
        %s237 = sand.u32 %s82, 1
        %s238 = scalar_lea.sflag [#allocation7], %s237
        %s239 = sand.u32 %s82, 1
        %s240 = smul.addr %s239, 128
        %s241 = scalar_lea.vmem [#allocation6], %s240
        // Predicated region
        $region37: #{tpu_custom_call.1} parent=31 // pred_check
          %p242 = pneg %p95
        $region38: #{tpu_custom_call.1} parent=31 // pred_check_branch
          %244 = sbr.rel (%p242) target = $region40
        $region39: #{tpu_custom_call.1} parent=31 // pred_region
          %245 = dma.done %s238, 2048
        $region40: #{tpu_custom_call.1} parent=31 // pred_fallthru
          _
        %s246 = sand.u32 %s54, 1
        %s247 = scalar_lea.sflag [#allocation4], %s246
        %s248 = sand.u32 %s54, 1
        %s249 = smul.addr %s248, 16
        %s250 = scalar_lea.vmem [#allocation3], %s249
        %p251 = pneg %p67
        %p252 = pneg %p64
        %s253 = sand.u32 %s82, 1
        %s254 = scalar_lea.sflag [#allocation7], %s253
        %s255 = sand.u32 %s82, 1
        %s256 = smul.addr %s255, 128
        %s257 = scalar_lea.vmem [#allocation6], %s256
        %p258 = pneg %p95
        %p259 = pneg %p92
        %p260 = scmp.lt.s32.totalorder %s28, 1
        %s261 = scalar_select %p260, %s28, 1
        %s262 = scalar_lea.vmem %s2, %s261
        %p263 = pneg %p121
        %p264 = pneg %p118
        %p265 = pneg %p149
        %p266 = pneg %p146
        %s267 = sand.u32 %s136, 1
        %s268 = scalar_lea.sflag [#allocation5], %s267
        %s269 = sand.u32 %s136, 1
        %s270 = smul.addr %s269, 16
        %s271 = scalar_lea.vmem [#allocation8], %s270
        %s272 = smul.u32 2, %s29
        %s273 = smul.u32 16, %s30
        %p274 = scmp.lt.s32.totalorder %s28, 1
        %s275 = scalar_select %p274, %s28, 1
        %s276 = scalar_lea.vmem %s2, %s275
        %s277 = smul.u32 2, %s29
        %p278 = scmp.eq.s32.totalorder %s30, 0
        // Predicated region
        $region41: #{tpu_custom_call.1} parent=31 // pred_check
          %p279 = pneg %p278
        $region42: #{tpu_custom_call.1} parent=31 // pred_check_branch
          %281 = sbr.rel (%p279) target = $region44
        $region43: #{tpu_custom_call.1} parent=31 // pred_region
          %282 = vst [vmem:[#allocation2] sm:$0xff] 0.0
          %283 = vst [vmem:[#allocation2 + $0x8] sm:$0xff] 0.0
        $region44: #{tpu_custom_call.1} parent=31 // pred_fallthru
          _
        %v284 = vld [vmem:[%s232] sm:$0xff]
        %v285 = vld [vmem:[%s232 + $0x8] sm:$0xff]
        %v286 = vld [vmem:[%s241] sm:$0xff]
        %v287 = vld [vmem:[%s241 + $0x8] sm:$0xff]
        %v288 = vld [vmem:[%s241 + $0x10] sm:$0xff]
        %v289 = vld [vmem:[%s241 + $0x18] sm:$0xff]
        %v290 = vld [vmem:[%s241 + $0x20] sm:$0xff]
        %v291 = vld [vmem:[%s241 + $0x28] sm:$0xff]
        %v292 = vld [vmem:[%s241 + $0x30] sm:$0xff]
        %v293 = vld [vmem:[%s241 + $0x38] sm:$0xff]
        %v294 = vld [vmem:[%s241 + $0x40] sm:$0xff]
        %v295 = vld [vmem:[%s241 + $0x48] sm:$0xff]
        %v296 = vld [vmem:[%s241 + $0x50] sm:$0xff]
        %v297 = vld [vmem:[%s241 + $0x58] sm:$0xff]
        %v298 = vld [vmem:[%s241 + $0x60] sm:$0xff]
        %v299 = vld [vmem:[%s241 + $0x68] sm:$0xff]
        %v300 = vld [vmem:[%s241 + $0x70] sm:$0xff]
        %v301 = vld [vmem:[%s241 + $0x78] sm:$0xff]
        %v302 = vld [vmem:[#allocation2] sm:$0xff]
        %v303 = vld [vmem:[#allocation2 + $0x8] sm:$0xff]
        %304 = vmatprep.subr.mxu0 0.0
        %305 = vmatpush1.msra.mxu0 %v301
        %306 = vmatprep.subr.mxu0 0.0
        %307 = vmatpush1.msra.mxu0 %v300
        %308 = vmatprep.subr.mxu0 0.0
        %309 = vmatpush1.msra.mxu0 %v299
        %310 = vmatprep.subr.mxu0 0.0
        %311 = vmatpush1.msra.mxu0 %v298
        %312 = vmatprep.subr.mxu0 0.0
        %313 = vmatpush1.msra.mxu0 %v297
        %314 = vmatprep.subr.mxu0 0.0
        %315 = vmatpush1.msra.mxu0 %v296
        %316 = vmatprep.subr.mxu0 0.0
        %317 = vmatpush1.msra.mxu0 %v295
        %318 = vmatprep.subr.mxu0 0.0
        %319 = vmatpush1.msra.mxu0 %v294
        %320 = vmatprep.subr.mxu0 0.0
        %321 = vmatpush1.msra.mxu0 %v293
        %322 = vmatprep.subr.mxu0 0.0
        %323 = vmatpush1.msra.mxu0 %v292
        %324 = vmatprep.subr.mxu0 0.0
        %325 = vmatpush1.msra.mxu0 %v291
        %326 = vmatprep.subr.mxu0 0.0
        %327 = vmatpush1.msra.mxu0 %v290
        %328 = vmatprep.subr.mxu0 0.0
        %329 = vmatpush1.msra.mxu0 %v289
        %330 = vmatprep.subr.mxu0 0.0
        %331 = vmatpush1.msra.mxu0 %v288
        %332 = vmatprep.subr.mxu0 0.0
        %333 = vmatpush1.msra.mxu0 %v287
        %334 = vmatprep.subr.mxu0 0.0
        %335 = vmatpush1.msra.mxu0 %v286
        %336 = vmatprep.subr.mxu0 0.0
        %337 = vmatpush2.msra.mxu0 0.0
        %338 = vmatprep.subr.mxu0 0.0
        %339 = vmatpush2.msra.mxu0 0.0
        %340 = vmatprep.subr.mxu0 0.0
        %341 = vmatpush2.msra.mxu0 0.0
        %342 = vmatprep.subr.mxu0 0.0
        %343 = vmatpush2.msra.mxu0 0.0
        %344 = vmatprep.subr.mxu0 0.0
        %345 = vmatpush2.msra.mxu0 0.0
        %346 = vmatprep.subr.mxu0 0.0
        %347 = vmatpush2.msra.mxu0 0.0
        %348 = vmatprep.subr.mxu0 0.0
        %349 = vmatpush2.msra.mxu0 0.0
        %350 = vmatprep.subr.mxu0 0.0
        %351 = vmatpush2.msra.mxu0 0.0
        %352 = vmatprep.subr.mxu0 0.0
        %353 = vmatpush2.msra.mxu0 0.0
        %354 = vmatprep.subr.mxu0 0.0
        %355 = vmatpush2.msra.mxu0 0.0
        %356 = vmatprep.subr.mxu0 0.0
        %357 = vmatpush2.msra.mxu0 0.0
        %358 = vmatprep.subr.mxu0 0.0
        %359 = vmatpush2.msra.mxu0 0.0
        %360 = vmatprep.subr.mxu0 0.0
        %361 = vmatpush2.msra.mxu0 0.0
        %362 = vmatprep.subr.mxu0 0.0
        %363 = vmatpush2.msra.mxu0 0.0
        %364 = vmatprep.subr.mxu0 0.0
        %365 = vmatpush2.msra.mxu0 0.0
        %366 = vmatprep.subr.mxu0 0.0
        %367 = vmatpush2.msra.mxu0 0.0
        %368 = vmatprep.mubr.f32.mxu0 0.0
        %369 = vmatmul.mubr.f32.gmra.mxu0 %v284
        %v370 = vpop.f32.mrf.mxu0
        %v371 = vadd.f32 0.0, %v370
        %v372 = vpop.f32.mrf.mxu0
        %373 = vmatprep.mubr.f32.mxu0 0.0
        %374 = vmatmul.mubr.f32.gmra.mxu0 %v285
        %v375 = vpop.f32.mrf.mxu0
        %v376 = vadd.f32 0.0, %v375
        %v377 = vpop.f32.mrf.mxu0
        %378 = vdwg.mxu0
        %v379 = vadd.f32 %v302, %v371
        %v380 = vadd.f32 %v303, %v376
        %381 = vst [vmem:[#allocation2] sm:$0xff] %v379
        %382 = vst [vmem:[#allocation2 + $0x8] sm:$0xff] %v380
        // Predicated region
        $region45: #{tpu_custom_call.1} parent=31 // pred_check
          %p383 = pneg %p278
        $region46: #{tpu_custom_call.1} parent=31 // pred_check_branch
          %385 = sbr.rel (%p383) target = $region48
        $region47: #{tpu_custom_call.1} parent=31 // pred_region
          %v386 = vld [vmem:[#allocation2] sm:$0xff]
          %v387 = vld [vmem:[#allocation2 + $0x8] sm:$0xff]
          %v388 = vld [vmem:[%s276] sm:$0x1]
          %v390 = vlaneseq
          %v391 = vshrl.u32 %v390, 7
          %v392 = vsub.s32 0, %v391
          %v393 = vrot.slane %v388, %v392
          %v395 = vadd.f32 %v386, %v393
          %v396 = vadd.f32 %v387, %v393
          %v397 = vmul.f32 %v395, 0.5
          %v398 = vmul.f32 %v396, 0.5
          %v399 = vmul.f32 %v395, 0.70710677
          %v400 = vmul.f32 %v396, 0.70710677
          %v401 = verf.f32.pop %v399
          %v402 = verf.f32.pop %v400
          %v403 = vadd.f32 %v401, 1.0
          %v404 = vadd.f32 %v402, 1.0
          %v405 = vmul.f32 %v397, %v403
          %v406 = vmul.f32 %v398, %v404
          %v407 = vmul.f32 %v405, %v405
          %v408 = vmul.f32 %v406, %v406
          %409 = vadd.xlane.f32.xlu0 %v407
          %v410 = vpop.xlane.xlu0 %409
          %411 = vadd.xlane.f32.xlu0 %v408
          %v412 = vpop.xlane.xlu0 %411
          %v413 = vmax.f32 %v410, 1e-24
          %v414 = vmax.f32 %v412, 1e-24
          %v415 = vrsqrt.pop %v413
          %v416 = vrsqrt.pop %v414
          %v417 = vmul.f32 %v405, %v415
          %v418 = vmul.f32 %v406, %v416
          %419 = vst [vmem:[%s271] sm:$0xff] %v417
          %420 = vst [vmem:[%s271 + $0x8] sm:$0xff] %v418
        $region48: #{tpu_custom_call.1} parent=31 // pred_fallthru
          _
        %s421 = sand.u32 %s136, 1
        %s422 = scalar_lea.sflag [#allocation5], %s421
        %s423 = sand.u32 %s136, 1
        %s424 = smul.addr %s423, 16
        %s425 = scalar_lea.vmem [#allocation8], %s424
        // Predicated region
        $region49: #{tpu_custom_call.1} parent=31 // pred_check
          %p426 = pneg %p146
        $region50: #{tpu_custom_call.1} parent=31 // pred_check_branch
          %428 = sbr.rel (%p426) target = $region52
        $region51: #{tpu_custom_call.1} parent=31 // pred_region
          %s429 = smul.u32 2, %s29
          %s431 = ssub.s32 256, 256
          %432 = vsyncadd %s422, %s431
          %s433 = smul.addr %s28, 2
          %s434 = sadd.s32 %s429, %s433
          %s435 = smul.addr %s434, 128
          %s436 = scalar_lea.hbm %s3, %s435
          %s437 = sshll.u32 %s425, 4
          %s438 = int_to_ptr.vmem [resolvable:$true] %s437
          %443 = dma.vmem_to_hbm [thread:$0]  %s438, 256, %s436, %s422, 128, 128, 8
        $region52: #{tpu_custom_call.1} parent=31 // pred_fallthru
          _
      $region32: #{tpu_custom_call.1} parent=5 // pred_fallthru
        _
      %p444 = scmp.le.s32.totalorder 2, %s18
      // Predicated region
      $region53: #{tpu_custom_call.1} parent=5 // pred_check
        %p445 = pneg %p444
      $region54: #{tpu_custom_call.1} parent=5 // pred_check_branch
        %447 = sbr.rel (%p445) target = $region56
      $region55: #{tpu_custom_call.1} parent=5 // pred_region
        %s448 = ssub.s32 %s18, 2
        // Predicated region
        $region57: #{tpu_custom_call.1} parent=55 // pred_check
          %p449 = pneg %p152
        $region58: #{tpu_custom_call.1} parent=55 // pred_check_branch
          %451 = sbr.rel (%p449) target = $region60
        $region59: #{tpu_custom_call.1} parent=55 // pred_region
          %s452 = sand.u32 %s137, 1
          %s453 = scalar_lea.sflag [#allocation5], %s452
          %s454 = sand.u32 %s137, 1
          %s455 = smul.addr %s454, 16
          %s456 = scalar_lea.vmem [#allocation8], %s455
          %457 = dma.done %s453, 256
        $region60: #{tpu_custom_call.1} parent=55 // pred_fallthru
          _
      $region56: #{tpu_custom_call.1} parent=5 // pred_fallthru
        _
    $region6: #{tpu_custom_call.1} parent=1 // loop_footer
      %s22 = sadd.s32 1, %s18
    $region7: #{tpu_custom_call.1} parent=1 // loop_footer_branch
      %17 = sbr.rel target = $region3
    $region8: #{tpu_custom_call.1} parent=1 // loop_exit
      _
    %458 = vsyncpa [#allocation4], 1
    %s459 = scalar_lea.sflag [#allocation4], 1
    %460 = vsyncpa %s459, 1
    %461 = vsyncpa [#allocation7], 1
    %s462 = scalar_lea.sflag [#allocation7], 1
    %463 = vsyncpa %s462, 1
    %464 = vsyncpa [#allocation5], 1
    %s465 = scalar_lea.sflag [#allocation5], 1
    %466 = vsyncpa %s465, 1

</llo_original>
